<compile_context>
chip_gen: v5e
topology: v5e:2x2
jax: 0.10.0
libtpu: 0.0.40
codegen_flags: <defaults>
</compile_context>

<pallas_src>
import jax
import jax.numpy as jnp
from jax.experimental import pallas as pl
from jax.experimental.pallas import tpu as pltpu


# --------------------------------------------------------------------------- #
# Kernel
# --------------------------------------------------------------------------- #
def _graph_decoder_kernel(z_ref, adj_ref, mask_ref, w_ref, b_ref, o_ref, p_ref):
    """One grid step = (batch tile i, adjacency-row tile j).

    z_ref:    (Bt, Np, L)   latent node features (bf16), full node extent
    adj_ref:  (Bt, Tn, Np)  adjacency row tile (bf16)
    mask_ref: (Bt, Tn, 1)   node validity mask (f32, 0/1)
    w_ref:    (L, Fp)       Linear weight, transposed + lane-padded (bf16)
    b_ref:    (1, Fp)       Linear bias, lane-padded (f32)
    o_ref:    (Bt, Tn, Fp)  output node predictions (bf16, lane-dense)
    p_ref:    (Bt, Np, Fp)  VMEM scratch holding P = Z @ W (bf16)
    """
    bt, n_pad, l = z_ref.shape
    fp = w_ref.shape[1]

    # ---- projection once per batch tile (reassociation: A@(Z@W) == (A@Z)@W) --
    @pl.when(pl.program_id(1) == 0)
    def _():
        # Np % 16 == 0 (bf16 sublane tile) -> this merge is a free layout change.
        z2 = z_ref[...].reshape(bt * n_pad, l)
        p = jnp.dot(z2, w_ref[...], preferred_element_type=jnp.float32)
        p_ref[...] = p.reshape(bt, n_pad, fp).astype(p_ref.dtype)

    # ---- graph propagation on the narrow (Fp) features for this row tile ----
    # TODO(synk): GraphDecoder.decode() is abstract; one A @ X message-passing
    # step is the concrete decode here (needs latent_dim == hidden_dim).
    y = jnp.einsum("brm,bmf->brf", adj_ref[...], p_ref[...],
                   preferred_element_type=jnp.float32)          # (Bt, Tn, Fp) f32

    # ---- bias + node-mask epilogue, fully 3D (no reshapes) -------------------
    y = y + b_ref[...]                  # (1, Fp) broadcasts over (Bt, Tn, Fp)
    o_ref[...] = (y * mask_ref[...]).astype(o_ref.dtype)


# --------------------------------------------------------------------------- #
# Tiling helpers
# --------------------------------------------------------------------------- #
def _round_up(x, m):
    return ((x + m - 1) // m) * m


def _vmem_capacity_bytes():
    """Generation-aware VMEM capacity (falls back to v7x per-core 64 MiB)."""
    try:
        info = pltpu.get_tpu_info()
        cap = getattr(info, "vmem_capacity_bytes", None)
        if cap:
            return int(cap)
    except Exception:
        pass
    return 64 << 20


def _pick_row_tile(n_pad, target=512):
    """Largest multiple-of-16 divisor of n_pad that is <= target."""
    if n_pad <= target:
        return n_pad
    t = (target // 16) * 16
    while t >= 16:
        if n_pad % t == 0:
            return t
        t -= 16
    return 16


def _pick_batch_tile(batch, n_pad, tn, l, fp, out_itemsize, budget_bytes):
    """Largest Bt whose per-step VMEM footprint (I/O blocks double-buffered,
    scratch + f32 intermediates single-buffered) fits the budget."""
    const = 2 * (l * fp * 2 + fp * 4)                     # weight + bias blocks
    per_elem = (
        2 * (n_pad * l * 2                                # latent block (bf16)
             + tn * n_pad * 2                             # adjacency block (bf16)
             + tn * 4                                     # node mask (f32)
             + tn * fp * out_itemsize)                    # output block
        + n_pad * fp * 2                                  # P scratch (bf16)
        + n_pad * fp * 4                                  # f32 projection intermediate
        + tn * fp * 4                                     # f32 A@P intermediate
    )
    bt = max(1, (budget_bytes - const) // max(per_elem, 1))
    bt = int(min(bt, batch))
    if batch >= 2:
        bt = min(bt, max(1, batch // 2))   # keep >=2 batch steps (megacore / pipeline)
    return max(1, bt)


# --------------------------------------------------------------------------- #
# Wrapper
# --------------------------------------------------------------------------- #
def graph_decoder(latent, adjacency, node_mask, weight, bias):
    """Fused GraphDecoder forward.

    latent:    (B, N, L) float
    adjacency: (B, N, N) float
    node_mask: (B, N, 1) float (0/1)
    weight:    (F, H)    PyTorch Linear layout (out_features, in_features), H == L
    bias:      (F,)
    returns    (B, N, F) in latent's dtype
    """
    b, n, l = latent.shape
    f, h = weight.shape
    assert h == l, "placeholder decode requires latent_dim == hidden_dim"
    assert adjacency.shape == (b, n, n)
    assert node_mask.shape == (b, n, 1)

    out_dtype = latent.dtype

    # Lane-dense output width; node count padded for bf16 (16, 128) tiling.
    fp = max(128, _round_up(f, 128))
    n_pad = _round_up(n, 16)
    tn = _pick_row_tile(n_pad)
    grid_r = n_pad // tn

    vmem_cap = _vmem_capacity_bytes()
    budget = vmem_cap // 4
    bt = _pick_batch_tile(b, n_pad, tn, l, fp, 2, budget)
    grid_b = (b + bt - 1) // bt
    b_pad = grid_b * bt

    # Wrapper-side dtype narrowing: halves the HBM streams feeding the MXU.
    z = latent.astype(jnp.bfloat16)
    adj = adjacency.astype(jnp.bfloat16)
    msk = node_mask.astype(jnp.float32)

    pad_b, pad_n = b_pad - b, n_pad - n
    if pad_b or pad_n:
        z = jnp.pad(z, ((0, pad_b), (0, pad_n), (0, 0)))
        adj = jnp.pad(adj, ((0, pad_b), (0, pad_n), (0, pad_n)))
        msk = jnp.pad(msk, ((0, pad_b), (0, pad_n), (0, 0)))

    w_pad = jnp.pad(weight.T.astype(jnp.bfloat16), ((0, 0), (0, fp - f)))   # (L, Fp)
    bias_row = jnp.pad(bias.astype(jnp.float32).reshape(1, f),
                       ((0, 0), (0, fp - f)))                               # (1, Fp)

    # Advisory cost so XLA schedules surrounding ops sensibly.
    flops = 2 * b_pad * n_pad * l * fp + 2 * b_pad * n_pad * n_pad * fp
    bytes_accessed = (z.size * 2 + adj.size * 2 + msk.size * 4
                      + w_pad.size * 2 + bias_row.size * 4
                      + b_pad * n_pad * fp * 2)

    out_padded = pl.pallas_call(
        _graph_decoder_kernel,
        out_shape=jax.ShapeDtypeStruct((b_pad, n_pad, fp), jnp.bfloat16),
        grid_spec=pltpu.PrefetchScalarGridSpec(
            num_scalar_prefetch=0,
            grid=(grid_b, grid_r),
            in_specs=[
                # Full node extent of Z per batch tile; constant across row tiles
                # so it is not re-DMA'd while j sweeps.
                pl.BlockSpec((bt, n_pad, l), lambda i, j: (i, 0, 0)),
                # Row tile of the adjacency (the dominant N^2 stream).
                pl.BlockSpec((bt, tn, n_pad), lambda i, j: (i, j, 0)),
                pl.BlockSpec((bt, tn, 1), lambda i, j: (i, j, 0)),
                # Constant block index -> fetched once for the whole grid.
                pl.BlockSpec((l, fp), lambda i, j: (0, 0)),
                pl.BlockSpec((1, fp), lambda i, j: (0, 0)),
            ],
            out_specs=pl.BlockSpec((bt, tn, fp), lambda i, j: (i, j, 0)),
            scratch_shapes=[pltpu.VMEM((bt, n_pad, fp), jnp.bfloat16)],
        ),
        compiler_params=pltpu.CompilerParams(
            dimension_semantics=("parallel", "arbitrary"),
            vmem_limit_bytes=int(min(vmem_cap, max(2 * budget, 32 << 20))),
        ),
        cost_estimate=pl.CostEstimate(
            flops=int(flops), transcendentals=0,
            bytes_accessed=int(bytes_accessed)),
    )(z, adj, msk, w_pad, bias_row)

    return out_padded[:b, :n, :f].astype(out_dtype)


# --------------------------------------------------------------------------- #
# Self-test
# --------------------------------------------------------------------------- #
if __name__ == "__main__":
    # Small shapes consistent with the module's forward signature.
    B = 2            # batch_size
    N = 8            # num_nodes
    LATENT = 32      # latent_feature_dim == hidden_feature_dim (identity-width decode)
    HIDDEN = 32      # hidden_feature_dim
    OUT = 16         # output_feature_dim

    key = jax.random.PRNGKey(0)
    k_z, k_adj, k_mask, k_w, k_b = jax.random.split(key, 5)

    latent = jax.random.normal(k_z, (B, N, LATENT), dtype=jnp.float32)
    adjacency = (jax.random.uniform(k_adj, (B, N, N)) > 0.5).astype(jnp.float32)
    node_mask = (jax.random.uniform(k_mask, (B, N, 1)) > 0.25).astype(jnp.float32)

    # Deterministic Linear(hidden, output) parameters (synthetic init, no checkpoint).
    bound = 1.0 / (HIDDEN ** 0.5)
    weight = jax.random.uniform(k_w, (OUT, HIDDEN), minval=-bound, maxval=bound,
                                dtype=jnp.float32)          # PyTorch layout (out, in)
    bias = jax.random.uniform(k_b, (OUT,), minval=-bound, maxval=bound,
                              dtype=jnp.float32)

    out = graph_decoder(latent, adjacency, node_mask, weight, bias)
    out = jax.block_until_ready(out)
    assert out.shape == (B, N, OUT)

    w_t = weight.T
    bias_row = bias.reshape(1, 1, OUT)

    # Reference 1: same math as the kernel (reassociated, bf16 operands, f32 acc).
    zb = latent.astype(jnp.bfloat16)
    wb = w_t.astype(jnp.bfloat16)
    p_ref = jnp.einsum("bnl,lf->bnf", zb, wb,
                       preferred_element_type=jnp.float32).astype(jnp.bfloat16)
    adjb = adjacency.astype(jnp.bfloat16)
    y_ref = jnp.einsum("bnm,bmf->bnf", adjb, p_ref,
                       preferred_element_type=jnp.float32)
    ref_matched = (y_ref + bias_row) * node_mask
    assert jnp.allclose(out, ref_matched, atol=2e-2, rtol=2e-2)

    # Reference 2: original-order f32 module semantics (loose: bf16 path).
    decoded_ref = jnp.einsum("bnm,bml->bnl", adjacency, latent)
    ref_f32 = (jnp.einsum("bnl,lf->bnf", decoded_ref, w_t) + bias_row) * node_mask
    assert jnp.allclose(out, ref_f32, atol=5e-2, rtol=5e-2)

    print("KERNEL_OK")
</pallas_src>

<mosaic_0001>
module attributes {stable_mosaic.version = 11 : i64} {
  func.func @_graph_decoder_kernel(%arg0: i32, %arg1: i32, %arg2: memref<1x16x32xbf16, #tpu.memory_space<vmem>>, %arg3: memref<1x16x16xbf16, #tpu.memory_space<vmem>>, %arg4: memref<1x16x1xf32, #tpu.memory_space<vmem>>, %arg5: memref<32x128xbf16, #tpu.memory_space<vmem>>, %arg6: memref<1x128xf32, #tpu.memory_space<vmem>>, %arg7: memref<1x16x128xbf16, #tpu.memory_space<vmem>>, %arg8: memref<1x16x128xbf16, #tpu.memory_space<vmem>>) attributes {dimension_semantics = [#tpu.dimension_semantics<parallel>, #tpu.dimension_semantics<arbitrary>], iteration_bounds = array<i64: 2, 1>, scalar_prefetch = 0 : i64, scratch_operands = 1 : i64, tpu.core_type = #tpu.core_type<tc>, window_params = [{transform_indices = @transform_0, window_bounds = array<i64: 1, 16, 32>}, {transform_indices = @transform_1, window_bounds = array<i64: 1, 16, 16>}, {transform_indices = @transform_2, window_bounds = array<i64: 1, 16, 1>}, {pipeline_mode = #tpu.pipeline_mode<synchronous>, transform_indices = @transform_3, window_bounds = array<i64: 32, 128>}, {pipeline_mode = #tpu.pipeline_mode<synchronous>, transform_indices = @transform_4, window_bounds = array<i64: 1, 128>}, {transform_indices = @transform_5, window_bounds = array<i64: 1, 16, 128>}]} {
    %c0_i32 = arith.constant 0 : i32
    %0 = arith.cmpi eq, %arg1, %c0_i32 : i32
    %1 = arith.extui %0 : i1 to i32
    %c0_i32_0 = arith.constant 0 : i32
    %2 = arith.cmpi ne, %1, %c0_i32_0 : i32
    scf.if %2 {
      %c0_14 = arith.constant 0 : index
      %c0_15 = arith.constant 0 : index
      %c0_16 = arith.constant 0 : index
      %15 = vector.load %arg2[%c0_14, %c0_15, %c0_16] : memref<1x16x32xbf16, #tpu.memory_space<vmem>>, vector<1x16x32xbf16>
      %16 = vector.shape_cast %15 : vector<1x16x32xbf16> to vector<16x32xbf16>
      %c0_17 = arith.constant 0 : index
      %c0_18 = arith.constant 0 : index
      %17 = vector.load %arg5[%c0_17, %c0_18] : memref<32x128xbf16, #tpu.memory_space<vmem>>, vector<32x128xbf16>
      %cst_19 = arith.constant dense<0.000000e+00> : vector<16x128xf32>
      %18 = tpu.matmul %16, %17, %cst_19 {dimension_numbers = #tpu.dot_dimension_numbers<[1], [0], [0], [1], [0, 0, 1, 1], [], []>} : vector<16x32xbf16>, vector<32x128xbf16>, vector<16x128xf32> -> vector<16x128xf32>
      %19 = vector.shape_cast %18 : vector<16x128xf32> to vector<1x16x128xf32>
      %20 = arith.truncf %19 : vector<1x16x128xf32> to vector<1x16x128xbf16>
      %c0_20 = arith.constant 0 : index
      %c0_21 = arith.constant 0 : index
      %c0_22 = arith.constant 0 : index
      %21 = vector.load %arg8[%c0_20, %c0_21, %c0_22] : memref<1x16x128xbf16, #tpu.memory_space<vmem>>, vector<1x16x128xbf16>
      tpu.vector_store %arg8[%c0_20, %c0_21, %c0_22], %20 {strides = array<i32>} : memref<1x16x128xbf16, #tpu.memory_space<vmem>>, vector<1x16x128xbf16>,
    } else {
    }
    %c0 = arith.constant 0 : index
    %c0_1 = arith.constant 0 : index
    %c0_2 = arith.constant 0 : index
    %3 = vector.load %arg3[%c0, %c0_1, %c0_2] : memref<1x16x16xbf16, #tpu.memory_space<vmem>>, vector<1x16x16xbf16>
    %c0_3 = arith.constant 0 : index
    %c0_4 = arith.constant 0 : index
    %c0_5 = arith.constant 0 : index
    %4 = vector.load %arg8[%c0_3, %c0_4, %c0_5] : memref<1x16x128xbf16, #tpu.memory_space<vmem>>, vector<1x16x128xbf16>
    "tpu.trace_start"() <{level = 10 : i32, message = "brm,bmf->brf"}> : () -> ()
    %cst = arith.constant dense<0.000000e+00> : vector<1x16x128xf32>
    %5 = tpu.matmul %3, %4, %cst {dimension_numbers = #tpu.dot_dimension_numbers<[2], [1], [1], [2], [0, 0, 0, 1, 1, 2], [0], [0]>} : vector<1x16x16xbf16>, vector<1x16x128xbf16>, vector<1x16x128xf32> -> vector<1x16x128xf32>
    "tpu.trace_stop"() : () -> ()
    %c0_6 = arith.constant 0 : index
    %c0_7 = arith.constant 0 : index
    %6 = vector.load %arg6[%c0_6, %c0_7] : memref<1x128xf32, #tpu.memory_space<vmem>>, vector<1x128xf32>
    %7 = vector.shape_cast %6 : vector<1x128xf32> to vector<1x1x128xf32>
    %8 = vector.broadcast %7 : vector<1x1x128xf32> to vector<1x16x128xf32>
    %9 = arith.addf %5, %8 : vector<1x16x128xf32>
    %c0_8 = arith.constant 0 : index
    %c0_9 = arith.constant 0 : index
    %c0_10 = arith.constant 0 : index
    %10 = vector.load %arg4[%c0_8, %c0_9, %c0_10] : memref<1x16x1xf32, #tpu.memory_space<vmem>>, vector<1x16x1xf32>
    %11 = vector.broadcast %10 : vector<1x16x1xf32> to vector<1x16x128xf32>
    %12 = arith.mulf %9, %11 : vector<1x16x128xf32>
    %13 = arith.truncf %12 : vector<1x16x128xf32> to vector<1x16x128xbf16>
    %c0_11 = arith.constant 0 : index
    %c0_12 = arith.constant 0 : index
    %c0_13 = arith.constant 0 : index
    %14 = vector.load %arg7[%c0_11, %c0_12, %c0_13] : memref<1x16x128xbf16, #tpu.memory_space<vmem>>, vector<1x16x128xbf16>
    tpu.vector_store %arg7[%c0_11, %c0_12, %c0_13], %13 {strides = array<i32>} : memref<1x16x128xbf16, #tpu.memory_space<vmem>>, vector<1x16x128xbf16>,
    return
  }
  func.func @transform_0(%arg0: i32, %arg1: i32) -> (i32, i32, i32) {
    %c0_i32 = arith.constant 0 : i32
    %c0_i32_0 = arith.constant 0 : i32
    %c0_i32_1 = arith.constant 0 : i32
    return %arg0, %c0_i32, %c0_i32_0 : i32, i32, i32
  }
  func.func @transform_1(%arg0: i32, %arg1: i32) -> (i32, i32, i32) {
    %c0_i32 = arith.constant 0 : i32
    %c0_i32_0 = arith.constant 0 : i32
    return %arg0, %arg1, %c0_i32 : i32, i32, i32
  }
  func.func @transform_2(%arg0: i32, %arg1: i32) -> (i32, i32, i32) {
    %c0_i32 = arith.constant 0 : i32
    %c0_i32_0 = arith.constant 0 : i32
    return %arg0, %arg1, %c0_i32 : i32, i32, i32
  }
  func.func @transform_3(%arg0: i32, %arg1: i32) -> (i32, i32) {
    %c0_i32 = arith.constant 0 : i32
    %c0_i32_0 = arith.constant 0 : i32
    %c0_i32_1 = arith.constant 0 : i32
    return %c0_i32, %c0_i32_0 : i32, i32
  }
  func.func @transform_4(%arg0: i32, %arg1: i32) -> (i32, i32) {
    %c0_i32 = arith.constant 0 : i32
    %c0_i32_0 = arith.constant 0 : i32
    %c0_i32_1 = arith.constant 0 : i32
    return %c0_i32, %c0_i32_0 : i32, i32
  }
  func.func @transform_5(%arg0: i32, %arg1: i32) -> (i32, i32, i32) {
    %c0_i32 = arith.constant 0 : i32
    %c0_i32_0 = arith.constant 0 : i32
    return %arg0, %arg1, %c0_i32 : i32, i32, i32
  }
}

</mosaic_0001>

<llo_original>
// kernel: tpu_custom_call.1
$region0: #{tpu_custom_call.1}
  #allocation0 [shape = 'u32[]', space=smem, size = 0x4, offset = 0x4, fixed_abs, tag = 'smem constant byte address 0x4 - core index']
  #allocation1 [shape = 'u32[72,128]{1,0:T(1,128)}', space=vmem, size = 0x9000, scoped, tag = 'internal scratch']
  #allocation2 [shape = 'bf16[1,16,128]{2,1,0:T(8,128)(2,1)}', space=vmem, size = 0x1000, scoped, tag = 'scratch operand']
  %s0 = inlined_call_operand.vmem [shape: bf16[2,16,32], index: 0, kind: input, shape index: {}]
  %s1 = inlined_call_operand.vmem [shape: bf16[2,16,16], index: 1, kind: input, shape index: {}]
  %s2 = inlined_call_operand.vmem [shape: f32[2,16,1], index: 2, kind: input, shape index: {}]
  %s3 = inlined_call_operand.hbm [shape: bf16[32,128], index: 3, kind: input, shape index: {}]
  %s4 = inlined_call_operand.vmem [shape: f32[1,128], index: 4, kind: input, shape index: {}]
  %s5 = inlined_call_operand.hbm [shape: bf16[2,16,128], index: 5, kind: output, shape index: {}]
  %s6 = sld [smem:[#allocation0]]
  $region61: #{tpu_custom_call.1} parent=0
    _
  %s8 = ssub.s32 1, %s6
  %s9 = scalar_select 0, %s8, %s6
  $region1: #{tpu_custom_call.1} parent=0
    #allocation3 [shape = 'u8[8192]{0}', space=vmem, size = 0x2000, scoped, tag = 'input window, operand 3, single buffered']
    #allocation4 [shape = 's32[2]{0}', space=sflag, size = 0x8, scoped, tag = 'scoped memory for tpu_custom_call.1']
    #allocation5 [shape = 's32[2]{0}', space=sflag, size = 0x8, scoped, tag = 'scoped memory for tpu_custom_call.1']
    #allocation6 [shape = 'u8[8192]{0}', space=vmem, size = 0x2000, scoped, tag = 'output window, operand 0']
    %10 = vsyncpa [#allocation4], 0
    %11 = vsyncpa [#allocation5], 0
    %s12 = scalar_lea.sflag [#allocation5], 1
    %13 = vsyncpa %s12, 0
    loop: start=0, step=1, limit=4
    $region2: #{tpu_custom_call.1} parent=1 // loop_pre_header
      _
    $region3: #{tpu_custom_call.1} parent=1 // loop_header
      %s15 = sphi 0, %s19
      %p16 = scmp.ge.s32.totalorder %s15, 4
      %s22 = sphi 0, %s34
      %s23 = sphi 0, %s30
      %s24 = sphi 0, %s22
      %s25 = sphi 0, %s23
      %s26 = sphi 0, %s24
      %s27 = sphi 0, %s25
      %s37 = sphi 0, %s39
      %s40 = sphi 0, %s37
      %s41 = sphi 0, %s40
      %s57 = sphi 0, %s41
      %s65 = sphi 0, %s67
      %s68 = sphi 0, %s65
      %s69 = sphi 0, %s68
      %s85 = sphi 0, %s69
      %s93 = sphi 0, %s95
      %s96 = sphi 0, %s93
      %s97 = sphi 0, %s96
      %s113 = sphi 0, %s97
      %s117 = sphi 0, %s117
      %s119 = sphi 0, %s117
      %s120 = sphi 0, %s119
      %s134 = sphi 0, %s120
      %s138 = sphi 0, %s138
      %s140 = sphi 0, %s138
      %s141 = sphi 0, %s140
      %s155 = sphi 0, %s141
      %s163 = sphi 0, %s165
      %s166 = sphi 0, %s163
      %s167 = sphi 0, %s166
      %s183 = sphi 0, %s167
    $region4: #{tpu_custom_call.1} parent=1 // loop_header_branch
      %18 = sbr.rel (%p16) target = $region8
    $region5: #{tpu_custom_call.1} parent=1 // loop_body
      %s20 = ssub.s32 %s15, 1
      %s21 = ssub.s32 %s15, 2
      %s28 = sadd.s32 1, %s23
      %p29 = scmp.ge.s32.totalorder %s28, 1
      %s30 = scalar_select %p29, 0, %s28
      %s31 = sadd.s32 1, %s22
      %s32 = scalar_select %p29, %s31, %s22
      %p33 = scmp.ge.s32.totalorder %s32, 2
      %s34 = scalar_select %p33, 0, %s32
      %s35 = ssub.s32 %s22, %s34
      %p36 = scmp.eq.s32.totalorder %s35, 0
      %s38 = sadd.s32 %s37, 1
      %s39 = scalar_select %p36, %s37, %s38
      %p42 = pneg %p36
      %p43 = scmp.eq.s32.totalorder %s15, 1
      %p44 = por %p42, %p43
      %p45 = scmp.ne.s32.totalorder %s37, %s40
      %p46 = scmp.eq.s32.totalorder %s15, 0
      %p47 = por %p45, %p46
      %p48 = scmp.ne.s32.totalorder %s37, %s40
      %p49 = scmp.eq.s32.totalorder %s20, 1
      %p50 = por %p48, %p49
      %p51 = scmp.ne.s32.totalorder %s40, %s41
      %p52 = scmp.eq.s32.totalorder %s20, 0
      %p53 = por %p51, %p52
      %p54 = scmp.ne.s32.totalorder %s40, %s41
      %p55 = scmp.eq.s32.totalorder %s21, 1
      %p56 = por %p54, %p55
      %p58 = scmp.ne.s32.totalorder %s41, %s57
      %p59 = scmp.eq.s32.totalorder %s21, 0
      %p60 = por %p58, %p59
      %s61 = ssub.s32 %s22, %s34
      %s62 = ssub.s32 %s23, %s30
      %s63 = sor.u32 %s61, %s62
      %p64 = scmp.eq.s32.totalorder %s63, 0
      %s66 = sadd.s32 %s65, 1
      %s67 = scalar_select %p64, %s65, %s66
      %p70 = pneg %p64
      %p71 = scmp.eq.s32.totalorder %s15, 1
      %p72 = por %p70, %p71
      %p73 = scmp.ne.s32.totalorder %s65, %s68
      %p74 = scmp.eq.s32.totalorder %s15, 0
      %p75 = por %p73, %p74
      %p76 = scmp.ne.s32.totalorder %s65, %s68
      %p77 = scmp.eq.s32.totalorder %s20, 1
      %p78 = por %p76, %p77
      %p79 = scmp.ne.s32.totalorder %s68, %s69
      %p80 = scmp.eq.s32.totalorder %s20, 0
      %p81 = por %p79, %p80
      %p82 = scmp.ne.s32.totalorder %s68, %s69
      %p83 = scmp.eq.s32.totalorder %s21, 1
      %p84 = por %p82, %p83
      %p86 = scmp.ne.s32.totalorder %s69, %s85
      %p87 = scmp.eq.s32.totalorder %s21, 0
      %p88 = por %p86, %p87
      %s89 = ssub.s32 %s22, %s34
      %s90 = ssub.s32 %s23, %s30
      %s91 = sor.u32 %s89, %s90
      %p92 = scmp.eq.s32.totalorder %s91, 0
      %s94 = sadd.s32 %s93, 1
      %s95 = scalar_select %p92, %s93, %s94
      %p98 = pneg %p92
      %p99 = scmp.eq.s32.totalorder %s15, 1
      %p100 = por %p98, %p99
      %p101 = scmp.ne.s32.totalorder %s93, %s96
      %p102 = scmp.eq.s32.totalorder %s15, 0
      %p103 = por %p101, %p102
      %p104 = scmp.ne.s32.totalorder %s93, %s96
      %p105 = scmp.eq.s32.totalorder %s20, 1
      %p106 = por %p104, %p105
      %p107 = scmp.ne.s32.totalorder %s96, %s97
      %p108 = scmp.eq.s32.totalorder %s20, 0
      %p109 = por %p107, %p108
      %p110 = scmp.ne.s32.totalorder %s96, %s97
      %p111 = scmp.eq.s32.totalorder %s21, 1
      %p112 = por %p110, %p111
      %p114 = scmp.ne.s32.totalorder %s97, %s113
      %p115 = scmp.eq.s32.totalorder %s21, 0
      %p116 = por %p114, %p115
      %s118 = sadd.s32 %s117, 1
      %p121 = scmp.eq.s32.totalorder %s15, 1
      %p122 = scmp.ne.s32.totalorder %s117, %s119
      %p123 = scmp.eq.s32.totalorder %s15, 0
      %p124 = por %p122, %p123
      %p125 = scmp.ne.s32.totalorder %s117, %s119
      %p126 = scmp.eq.s32.totalorder %s20, 1
      %p127 = por %p125, %p126
      %p128 = scmp.ne.s32.totalorder %s119, %s120
      %p129 = scmp.eq.s32.totalorder %s20, 0
      %p130 = por %p128, %p129
      %p131 = scmp.ne.s32.totalorder %s119, %s120
      %p132 = scmp.eq.s32.totalorder %s21, 1
      %p133 = por %p131, %p132
      %p135 = scmp.ne.s32.totalorder %s120, %s134
      %p136 = scmp.eq.s32.totalorder %s21, 0
      %p137 = por %p135, %p136
      %s139 = sadd.s32 %s138, 1
      %p142 = scmp.eq.s32.totalorder %s15, 1
      %p143 = scmp.ne.s32.totalorder %s138, %s140
      %p144 = scmp.eq.s32.totalorder %s15, 0
      %p145 = por %p143, %p144
      %p146 = scmp.ne.s32.totalorder %s138, %s140
      %p147 = scmp.eq.s32.totalorder %s20, 1
      %p148 = por %p146, %p147
      %p149 = scmp.ne.s32.totalorder %s140, %s141
      %p150 = scmp.eq.s32.totalorder %s20, 0
      %p151 = por %p149, %p150
      %p152 = scmp.ne.s32.totalorder %s140, %s141
      %p153 = scmp.eq.s32.totalorder %s21, 1
      %p154 = por %p152, %p153
      %p156 = scmp.ne.s32.totalorder %s141, %s155
      %p157 = scmp.eq.s32.totalorder %s21, 0
      %p158 = por %p156, %p157
      %s159 = ssub.s32 %s22, %s34
      %s160 = ssub.s32 %s23, %s30
      %s161 = sor.u32 %s159, %s160
      %p162 = scmp.eq.s32.totalorder %s161, 0
      %s164 = sadd.s32 %s163, 1
      %s165 = scalar_select %p162, %s163, %s164
      %p168 = pneg %p162
      %p169 = scmp.eq.s32.totalorder %s15, 1
      %p170 = por %p168, %p169
      %p171 = scmp.ne.s32.totalorder %s163, %s166
      %p172 = scmp.eq.s32.totalorder %s15, 0
      %p173 = por %p171, %p172
      %p174 = scmp.ne.s32.totalorder %s163, %s166
      %p175 = scmp.eq.s32.totalorder %s20, 1
      %p176 = por %p174, %p175
      %p177 = scmp.ne.s32.totalorder %s166, %s167
      %p178 = scmp.eq.s32.totalorder %s20, 0
      %p179 = por %p177, %p178
      %p180 = scmp.ne.s32.totalorder %s166, %s167
      %p181 = scmp.eq.s32.totalorder %s21, 1
      %p182 = por %p180, %p181
      %p184 = scmp.ne.s32.totalorder %s167, %s183
      %p185 = scmp.eq.s32.totalorder %s21, 0
      %p186 = por %p184, %p185
      %p187 = scmp.le.s32.totalorder 1, %s15
      %p188 = scmp.lt.s32.totalorder %s15, 3
      %p189 = pnand %p187, %p188
      %p190 = pneg %p189
      // Predicated region
      $region9: #{tpu_custom_call.1} parent=5 // pred_check
        _
      $region10: #{tpu_custom_call.1} parent=5 // pred_check_branch
        %192 = sbr.rel (%p189) target = $region12
      $region11: #{tpu_custom_call.1} parent=5 // pred_region
        %s193 = ssub.s32 %s15, 1
        // Predicated region
        $region13: #{tpu_custom_call.1} parent=11 // pred_check
          %p194 = pneg %p130
        $region14: #{tpu_custom_call.1} parent=11 // pred_check_branch
          %196 = sbr.rel (%p194) target = $region16
        $region15: #{tpu_custom_call.1} parent=11 // pred_region
          %198 = vsyncadd [#allocation4], 0
          %s199 = sshll.u32 %s3, 4
          %s200 = int_to_ptr.hbm [resolvable:$true] %s199
          %s201 = sshll.u32 [#allocation3], 4
          %s202 = int_to_ptr.vmem [resolvable:$true] %s201
          %207 = dma.hbm_to_vmem [thread:$0]  %s200, 256, %s202, [#allocation4], 64, 64, 4
        $region16: #{tpu_custom_call.1} parent=11 // pred_fallthru
          _
        // Predicated region
        $region17: #{tpu_custom_call.1} parent=11 // pred_check
          %p208 = pneg %p151
        $region18: #{tpu_custom_call.1} parent=11 // pred_check_branch
          %210 = sbr.rel (%p208) target = $region20
        $region19: #{tpu_custom_call.1} parent=11 // pred_region
          _
        $region20: #{tpu_custom_call.1} parent=11 // pred_fallthru
          _
      $region12: #{tpu_custom_call.1} parent=5 // pred_fallthru
        _
      %p211 = scmp.lt.s32.totalorder %s15, 2
      // Predicated region
      $region21: #{tpu_custom_call.1} parent=5 // pred_check
        %p212 = pneg %p211
      $region22: #{tpu_custom_call.1} parent=5 // pred_check_branch
        %214 = sbr.rel (%p212) target = $region24
      $region23: #{tpu_custom_call.1} parent=5 // pred_region
        // Predicated region
        $region25: #{tpu_custom_call.1} parent=23 // pred_check
          %p215 = pneg %p47
        $region26: #{tpu_custom_call.1} parent=23 // pred_check_branch
          %217 = sbr.rel (%p215) target = $region28
        $region27: #{tpu_custom_call.1} parent=23 // pred_region
          %p218 = scmp.lt.s32.totalorder %s22, 1
          %s219 = scalar_select %p218, %s22, 1
          %s220 = smul.addr %s219, 2
          %s221 = smul.addr %s220, 4
          %s222 = scalar_lea.vmem %s0, %s221
        $region28: #{tpu_custom_call.1} parent=23 // pred_fallthru
          _
        // Predicated region
        $region29: #{tpu_custom_call.1} parent=23 // pred_check
          %p223 = pneg %p75
        $region30: #{tpu_custom_call.1} parent=23 // pred_check_branch
          %225 = sbr.rel (%p223) target = $region32
        $region31: #{tpu_custom_call.1} parent=23 // pred_region
          %s226 = smul.u32 2, %s23
          %p227 = scmp.lt.s32.totalorder %s22, 1
          %s228 = scalar_select %p227, %s22, 1
          %p229 = scmp.lt.s32.totalorder %s226, 1
          %s230 = scalar_select %p229, %s226, 1
          %s231 = smul.addr %s228, 2
          %s232 = sadd.s32 %s230, %s231
          %s233 = smul.addr %s232, 4
          %s234 = scalar_lea.vmem %s1, %s233
          %s235 = smul.u32 2, %s23
        $region32: #{tpu_custom_call.1} parent=23 // pred_fallthru
          _
        // Predicated region
        $region33: #{tpu_custom_call.1} parent=23 // pred_check
          %p236 = pneg %p103
        $region34: #{tpu_custom_call.1} parent=23 // pred_check_branch
          %238 = sbr.rel (%p236) target = $region36
        $region35: #{tpu_custom_call.1} parent=23 // pred_region
          %s239 = smul.u32 2, %s23
          %p240 = scmp.lt.s32.totalorder %s22, 1
          %s241 = scalar_select %p240, %s22, 1
          %p242 = scmp.lt.s32.totalorder %s239, 1
          %s243 = scalar_select %p242, %s239, 1
          %s244 = smul.addr %s241, 2
          %s245 = sadd.s32 %s243, %s244
          %s246 = smul.addr %s245, 8
          %s247 = scalar_lea.vmem %s2, %s246
          %s248 = smul.u32 2, %s23
        $region36: #{tpu_custom_call.1} parent=23 // pred_fallthru
          _
      $region24: #{tpu_custom_call.1} parent=5 // pred_fallthru
        _
      %p249 = scmp.le.s32.totalorder 1, %s15
      %p250 = scmp.lt.s32.totalorder %s15, 3
      %p251 = pnand %p249, %p250
      %p252 = pneg %p251
      // Predicated region
      $region37: #{tpu_custom_call.1} parent=5 // pred_check
        _
      $region38: #{tpu_custom_call.1} parent=5 // pred_check_branch
        %254 = sbr.rel (%p251) target = $region40
      $region39: #{tpu_custom_call.1} parent=5 // pred_region
        %s255 = ssub.s32 %s15, 1
        // Predicated region
        $region41: #{tpu_custom_call.1} parent=39 // pred_check
          %p256 = pneg %p130
        $region42: #{tpu_custom_call.1} parent=39 // pred_check_branch
          %258 = sbr.rel (%p256) target = $region44
        $region43: #{tpu_custom_call.1} parent=39 // pred_region
          %260 = dma.done [#allocation4], 256
        $region44: #{tpu_custom_call.1} parent=39 // pred_fallthru
          _
        %p261 = scmp.lt.s32.totalorder %s24, 1
        %s262 = scalar_select %p261, %s24, 1
        %s263 = smul.addr %s262, 2
        %s264 = smul.addr %s263, 4
        %s265 = scalar_lea.vmem %s0, %s264
        %p266 = pneg %p53
        %p267 = pneg %p50
        %s268 = smul.u32 2, %s25
        %p269 = scmp.lt.s32.totalorder %s24, 1
        %s270 = scalar_select %p269, %s24, 1
        %p271 = scmp.lt.s32.totalorder %s268, 1
        %s272 = scalar_select %p271, %s268, 1
        %s273 = smul.addr %s270, 2
        %s274 = sadd.s32 %s272, %s273
        %s275 = smul.addr %s274, 4
        %s276 = scalar_lea.vmem %s1, %s275
        %p277 = pneg %p81
        %p278 = pneg %p78
        %s279 = smul.u32 2, %s25
        %p280 = scmp.lt.s32.totalorder %s24, 1
        %s281 = scalar_select %p280, %s24, 1
        %p282 = scmp.lt.s32.totalorder %s279, 1
        %s283 = scalar_select %p282, %s279, 1
        %s284 = smul.addr %s281, 2
        %s285 = sadd.s32 %s283, %s284
        %s286 = smul.addr %s285, 8
        %s287 = scalar_lea.vmem %s2, %s286
        %p288 = pneg %p109
        %p289 = pneg %p106
        %p290 = pneg %p130
        %p291 = pneg %p127
        %p292 = pneg %p151
        %p293 = pneg %p148
        %p294 = pneg %p179
        %p295 = pneg %p176
        %s296 = sand.u32 %s166, 1
        %s297 = scalar_lea.sflag [#allocation5], %s296
        %s298 = sand.u32 %s166, 1
        %s299 = smul.addr %s298, 8
        %s300 = scalar_lea.vmem [#allocation6], %s299
        %p301 = scmp.lt.s32.totalorder %s24, 1
        %s302 = scalar_select %p301, %s24, 1
        %s303 = smul.addr %s302, 2
        %s304 = smul.addr %s303, 4
        %s305 = scalar_lea.vmem %s0, %s304
        %s306 = smul.u32 2, %s25
        %p307 = scmp.lt.s32.totalorder %s24, 1
        %s308 = scalar_select %p307, %s24, 1
        %p309 = scmp.lt.s32.totalorder %s306, 1
        %s310 = scalar_select %p309, %s306, 1
        %s311 = smul.addr %s308, 2
        %s312 = sadd.s32 %s310, %s311
        %s313 = smul.addr %s312, 4
        %s314 = scalar_lea.vmem %s1, %s313
        %s315 = smul.u32 2, %s25
        %s316 = smul.u32 2, %s25
        %p317 = scmp.lt.s32.totalorder %s24, 1
        %s318 = scalar_select %p317, %s24, 1
        %p319 = scmp.lt.s32.totalorder %s316, 1
        %s320 = scalar_select %p319, %s316, 1
        %s321 = smul.addr %s318, 2
        %s322 = sadd.s32 %s320, %s321
        %s323 = smul.addr %s322, 8
        %s324 = scalar_lea.vmem %s2, %s323
        %s325 = smul.u32 2, %s25
        %s326 = smul.u32 2, %s25
        %p328 = scmp.eq.s32.totalorder %s25, 0
        // Predicated region
        $region45: #{tpu_custom_call.1} parent=39 // pred_check
          %p329 = pneg %p328
        $region46: #{tpu_custom_call.1} parent=39 // pred_check_branch
          %331 = sbr.rel (%p329) target = $region48
        $region47: #{tpu_custom_call.1} parent=39 // pred_region
          %v332 = vld [vmem:[%s305] sm:$0xf]
          %v333 = vld [vmem:[%s305 + $0x4] sm:$0xf]
          %v334 = vld [vmem:[#allocation3] sm:$0xf]
          %v335 = vld [vmem:[#allocation3 + $0x4] sm:$0xf]
          %v336 = vld [vmem:[#allocation3 + $0x8] sm:$0xf]
          %v337 = vld [vmem:[#allocation3 + $0xc] sm:$0xf]
          %v340 = vunpack.c.l.b16 %v332
          %v341 = vunpack.c.l.b16 %v333
          %v342 = vpack.c.b16 %v341, %v340
          %v347 = vunpack.c.l.b16 %v334
          %v348 = vunpack.c.l.b16 %v335
          %v349 = vunpack.c.l.b16 %v336
          %v350 = vunpack.c.l.b16 %v337
          %v351 = vpack.c.b16 %v348, %v347
          %v352 = vpack.c.b16 %v350, %v349
          %vm355 = vcmask 261120
          %v357 = vsel %vm355, %v342, 0
          %359 = vmatpush.bf16.msra.mxu0 0
          %360 = vmatpush.bf16.msra.mxu0 0
          %361 = vmatpush.bf16.msra.mxu0 0
          %362 = vmatpush.bf16.msra.mxu0 0
          %363 = vmatpush.bf16.msra.mxu0 0
          %364 = vmatpush.bf16.msra.mxu0 0
          %365 = vmatpush.bf16.msra.mxu0 %v352
          %366 = vmatpush.bf16.msra.mxu0 %v351
          %367 = vmatmul.bf16.gmra.mxu0 %v357
          %v368 = vpop.f32.mrf.mxu0
          %v369 = vadd.f32 0.0, %v368
          %v370 = vpop.f32.mrf.mxu0
          %v371 = vadd.f32 0.0, %v370
          %372 = vdwg.mxu0
          %v373 = vpack.c.bf16 %v369, %v369
          %v374 = vpack.c.bf16 %v371, %v371
          %375 = vst [vmem:[#allocation2] sm:$0xf] %v373
          %376 = vst [vmem:[#allocation2 + $0x4] sm:$0xf] %v374
        $region48: #{tpu_custom_call.1} parent=39 // pred_fallthru
          _
        %v377 = vld [vmem:[%s314] sm:$0xf]
        %v378 = vld [vmem:[%s314 + $0x4] sm:$0xf]
        %v379 = vld [vmem:[#allocation2] sm:$0xf]
        %v380 = vld [vmem:[#allocation2 + $0x4] sm:$0xf]
        %v381 = vld [vmem:[%s4] sm:$0x1]
        %v383 = vperm.slane %v381, 0
        %v387 = vunpack.c.l.b16 %v377
        %v388 = vunpack.c.l.b16 %v378
        %v389 = vpack.c.b16 %v388, %v387
        %v392 = vunpack.c.l.b16 %v379
        %v393 = vunpack.c.l.b16 %v380
        %v394 = vpack.c.b16 %v393, %v392
        %vm396 = vcmask 130048
        %v398 = vsel %vm396, %v389, 0
        %400 = vmatpush.bf16.msra.mxu0 0
        %401 = vmatpush.bf16.msra.mxu0 0
        %402 = vmatpush.bf16.msra.mxu0 0
        %403 = vmatpush.bf16.msra.mxu0 0
        %404 = vmatpush.bf16.msra.mxu0 0
        %405 = vmatpush.bf16.msra.mxu0 0
        %406 = vmatpush.bf16.msra.mxu0 0
        %407 = vmatpush.bf16.msra.mxu0 %v394
        %408 = vmatmul.bf16.gmra.mxu0 %v398
        %v409 = vpop.f32.mrf.mxu0
        %v410 = vadd.f32 %v383, %v409
        %v411 = vpop.f32.mrf.mxu0
        %v412 = vadd.f32 %v383, %v411
        %413 = vdwg.mxu0
        %v414 = vld [vmem:[%s324] sm:$0xff]
        %v415 = vld [vmem:[%s324 + $0x8] sm:$0xff]
        %417 = vset.pattern.permute.xlu0 0
        %418 = vperm.xlu0 %417, %v414
        %v419 = vpop.permute.xlu0 %418
        %422 = vset.pattern.permute.xlu0 0
        %423 = vperm.xlu0 %422, %v415
        %v424 = vpop.permute.xlu0 %423
        %v426 = vmul.f32 %v410, %v419
        %v427 = vmul.f32 %v412, %v424
        %v428 = vpack.c.bf16 %v426, %v426
        %v429 = vpack.c.bf16 %v427, %v427
        %430 = vst [vmem:[%s300] sm:$0xf] %v428
        %431 = vst [vmem:[%s300 + $0x4] sm:$0xf] %v429
        %s432 = sand.u32 %s166, 1
        %s433 = scalar_lea.sflag [#allocation5], %s432
        %s434 = sand.u32 %s166, 1
        %s435 = smul.addr %s434, 8
        %s436 = scalar_lea.vmem [#allocation6], %s435
        // Predicated region
        $region49: #{tpu_custom_call.1} parent=39 // pred_check
          %p437 = pneg %p176
        $region50: #{tpu_custom_call.1} parent=39 // pred_check_branch
          %439 = sbr.rel (%p437) target = $region52
        $region51: #{tpu_custom_call.1} parent=39 // pred_region
          %s440 = smul.u32 2, %s25
          %442 = vsyncadd %s433, 0
          %s443 = smul.addr %s24, 2
          %s444 = sadd.s32 %s440, %s443
          %s445 = smul.addr %s444, 4
          %s446 = scalar_lea.hbm %s5, %s445
          %s447 = sshll.u32 %s436, 4
          %s448 = int_to_ptr.vmem [resolvable:$true] %s447
          %s449 = sshll.u32 %s446, 4
          %s450 = int_to_ptr.hbm [resolvable:$true] %s449
          %455 = dma.vmem_to_hbm [thread:$0]  %s448, 128, %s450, %s433, 64, 64, 4
        $region52: #{tpu_custom_call.1} parent=39 // pred_fallthru
          _
      $region40: #{tpu_custom_call.1} parent=5 // pred_fallthru
        _
      %p456 = scmp.le.s32.totalorder 2, %s15
      // Predicated region
      $region53: #{tpu_custom_call.1} parent=5 // pred_check
        %p457 = pneg %p456
      $region54: #{tpu_custom_call.1} parent=5 // pred_check_branch
        %459 = sbr.rel (%p457) target = $region56
      $region55: #{tpu_custom_call.1} parent=5 // pred_region
        %s460 = ssub.s32 %s15, 2
        // Predicated region
        $region57: #{tpu_custom_call.1} parent=55 // pred_check
          %p461 = pneg %p182
        $region58: #{tpu_custom_call.1} parent=55 // pred_check_branch
          %463 = sbr.rel (%p461) target = $region60
        $region59: #{tpu_custom_call.1} parent=55 // pred_region
          %s464 = sand.u32 %s167, 1
          %s465 = scalar_lea.sflag [#allocation5], %s464
          %s466 = sand.u32 %s167, 1
          %s467 = smul.addr %s466, 8
          %s468 = scalar_lea.vmem [#allocation6], %s467
          %470 = dma.done %s465, 128
        $region60: #{tpu_custom_call.1} parent=55 // pred_fallthru
          _
      $region56: #{tpu_custom_call.1} parent=5 // pred_fallthru
        _
    $region6: #{tpu_custom_call.1} parent=1 // loop_footer
      %s19 = sadd.s32 1, %s15
    $region7: #{tpu_custom_call.1} parent=1 // loop_footer_branch
      %14 = sbr.rel target = $region3
    $region8: #{tpu_custom_call.1} parent=1 // loop_exit
      _
    %471 = vsyncpa [#allocation4], 1
    %s472 = scalar_lea.sflag [#allocation4], 1
    %473 = vsyncpa %s472, 1
    %474 = vsyncpa [#allocation5], 1
    %s475 = scalar_lea.sflag [#allocation5], 1
    %476 = vsyncpa %s475, 1

</llo_original>
